<compile_context>
chip_gen: v7x
topology: tpu7x:2x2x1
jax: 0.10.0
libtpu: 0.0.40
codegen_flags: <defaults>
</compile_context>

<pallas_src>
import jax
import jax.numpy as jnp
from jax import lax
from jax.experimental import pallas as pl
from jax.experimental.pallas import tpu as pltpu

IN_DIM = 128
HID_DIM = 64          # hidden channels live on sublanes -> no padding needed
OUT_DIM = 1
BN_EPS = 1e-5
MAX_TILE_N = 8192     # rows per grid step (4 MiB f32 x-tile)
VMEM_LIMIT_BYTES = 32 * 1024 * 1024


def _round_up(x, m):
    return ((x + m - 1) // m) * m


def _cdiv(a, b):
    return (a + b - 1) // b


def fn_regressor_kernel(x_ref, w1_ref, b1_ref, w2_ref, b2_ref, o_ref):
    x = x_ref[...]                        # (TILE_N, 128) f32, batch on sublanes
    w1 = w1_ref[...]                      # (64, 128), BN-folded, rows = hidden chan

    # Linear(128 -> 64) + folded BatchNorm, computed transposed so the batch
    # axis lands on lanes:  hT[c, n] = sum_k w1[c, k] * x[n, k]
    ht = lax.dot_general(w1, x, (((1,), (1,)), ((), ())),
                         preferred_element_type=jnp.float32)    # (64, TILE_N)
    ht = ht + b1_ref[...]                 # (64, 1) broadcast along lanes
    ht = jnp.maximum(ht, 0.0)             # ReLU

    # Dropout(0.2): identity in eval mode.

    # Linear(64 -> 1): VPU multiply + sublane reduction (lane-dense result).
    y = jnp.sum(ht * w2_ref[...], axis=0, keepdims=True) + b2_ref[0, 0]  # (1, TILE_N)

    # Softplus (PyTorch default: beta=1, threshold=20)
    y = jnp.where(y > 20.0, y, jnp.log1p(jnp.exp(jnp.minimum(y, 20.0))))

    o_ref[...] = y.astype(o_ref.dtype)


def fn_regressor_forward(feature, params):
    """feature: (N, 128) float32, any N >= 1. Returns (N, 1) float32."""
    N, C = feature.shape
    assert C == IN_DIM

    # ---- fold eval-mode BatchNorm into the first Linear (wrapper glue) ----
    inv_std = 1.0 / jnp.sqrt(params["bn_var"] + BN_EPS)
    scale = params["bn_w"] * inv_std                               # (64,)
    shift = params["bn_b"] - params["bn_mean"] * scale             # (64,)
    w1f = (params["w1"] * scale[:, None]).astype(jnp.float32)      # (64, 128)
    b1f = (params["b1"] * scale + shift).reshape(HID_DIM, 1).astype(jnp.float32)
    w2c = params["w2"].reshape(HID_DIM, 1).astype(jnp.float32)     # (64, 1)
    b2 = params["b2"].reshape(1, 1).astype(jnp.float32)            # (1, 1) -> SMEM

    # ---- tiling: large lane/sublane-aligned tiles; >=2 tiles when possible ----
    n128 = _round_up(N, 128)
    num_tiles = _cdiv(n128, MAX_TILE_N)
    if num_tiles == 1 and n128 >= 256:
        num_tiles = 2          # v7x: keep both TensorCores busy on the parallel axis
    tile_n = _round_up(_cdiv(N, num_tiles), 128)       # <= MAX_TILE_N by construction
    n_pad = num_tiles * tile_n

    x = feature.astype(jnp.float32)
    if n_pad != N:
        x = jnp.pad(x, ((0, n_pad - N), (0, 0)))

    out = pl.pallas_call(
        fn_regressor_kernel,
        out_shape=jax.ShapeDtypeStruct((num_tiles, tile_n), jnp.float32),
        grid_spec=pltpu.PrefetchScalarGridSpec(
            num_scalar_prefetch=0,
            grid=(num_tiles,),
            in_specs=[
                pl.BlockSpec((tile_n, IN_DIM), lambda i: (i, 0)),      # x tile
                pl.BlockSpec((HID_DIM, IN_DIM), lambda i: (0, 0)),     # W1 (BN-folded)
                pl.BlockSpec((HID_DIM, 1), lambda i: (0, 0)),          # b1 (folded)
                pl.BlockSpec((HID_DIM, 1), lambda i: (0, 0)),          # w2 column
                pl.BlockSpec(memory_space=pltpu.MemorySpace.SMEM),     # b2 scalar
            ],
            out_specs=pl.BlockSpec((1, tile_n), lambda i: (i, 0)),     # lane-dense slab
        ),
        compiler_params=pltpu.CompilerParams(
            dimension_semantics=("parallel",),
            vmem_limit_bytes=VMEM_LIMIT_BYTES),
    )(x, w1f, b1f, w2c, b2)

    # (num_tiles, tile_n) row-major == batch order; drop padding rows.
    return out.reshape(n_pad, 1)[:N]


def init_params(key):
    """Deterministic init matching FNRegressor._initialize_weights."""
    k1, k2 = jax.random.split(key)

    def xavier_uniform(k, fan_out, fan_in):
        bound = (6.0 / (fan_in + fan_out)) ** 0.5
        return jax.random.uniform(k, (fan_out, fan_in), jnp.float32, -bound, bound)

    return {
        "w1": xavier_uniform(k1, HID_DIM, IN_DIM),   # (64, 128)
        "b1": jnp.zeros((HID_DIM,), jnp.float32),
        "bn_w": jnp.ones((HID_DIM,), jnp.float32),
        "bn_b": jnp.zeros((HID_DIM,), jnp.float32),
        "bn_mean": jnp.zeros((HID_DIM,), jnp.float32),
        "bn_var": jnp.ones((HID_DIM,), jnp.float32),
        "w2": xavier_uniform(k2, OUT_DIM, HID_DIM),  # (1, 64)
        "b2": jnp.zeros((OUT_DIM,), jnp.float32),
    }


def fn_regressor_ref(feature, params):
    """Pure-JAX reference (eval mode) for correctness checking."""
    h = feature @ params["w1"].T + params["b1"]
    inv_std = 1.0 / jnp.sqrt(params["bn_var"] + BN_EPS)
    h = (h - params["bn_mean"]) * inv_std * params["bn_w"] + params["bn_b"]
    h = jnp.maximum(h, 0.0)
    y = h @ params["w2"].T + params["b2"]
    return jnp.where(y > 20.0, y, jnp.log1p(jnp.exp(jnp.minimum(y, 20.0))))


if __name__ == "__main__":
    key = jax.random.PRNGKey(0)
    k_param, k_x1, k_x2 = jax.random.split(key, 3)

    params = init_params(k_param)

    # Case 1: N not a multiple of 8/128 -> exercises padding, single tile.
    N1 = 37
    feat1 = jax.random.normal(k_x1, (N1, IN_DIM), jnp.float32)
    out1 = jax.block_until_ready(fn_regressor_forward(feat1, params))
    ref1 = fn_regressor_ref(feat1, params)
    assert out1.shape == (N1, OUT_DIM)
    assert jnp.allclose(out1, ref1, atol=1e-5, rtol=1e-4)

    # Case 2: enough rows to trigger the 2-tile (two-TensorCore) path.
    N2 = 300
    feat2 = jax.random.normal(k_x2, (N2, IN_DIM), jnp.float32)
    out2 = jax.block_until_ready(fn_regressor_forward(feat2, params))
    ref2 = fn_regressor_ref(feat2, params)
    assert out2.shape == (N2, OUT_DIM)
    assert jnp.allclose(out2, ref2, atol=1e-5, rtol=1e-4)

    print("KERNEL_OK")
</pallas_src>

<mosaic_0001>
module attributes {stable_mosaic.version = 11 : i64} {
  func.func @fn_regressor_kernel(%arg0: i32, %arg1: memref<128x128xf32, #tpu.memory_space<vmem>>, %arg2: memref<64x128xf32, #tpu.memory_space<vmem>>, %arg3: memref<64x1xf32, #tpu.memory_space<vmem>>, %arg4: memref<64x1xf32, #tpu.memory_space<vmem>>, %arg5: memref<1x1xf32, #tpu.memory_space<smem>>, %arg6: memref<1x128xf32, #tpu.memory_space<vmem>>) attributes {dimension_semantics = [#tpu.dimension_semantics<parallel>], iteration_bounds = array<i64: 1>, scalar_prefetch = 0 : i64, scratch_operands = 0 : i64, tpu.core_type = #tpu.core_type<tc>, window_params = [{transform_indices = @transform_0, window_bounds = array<i64: 128, 128>}, {pipeline_mode = #tpu.pipeline_mode<synchronous>, transform_indices = @transform_1, window_bounds = array<i64: 64, 128>}, {pipeline_mode = #tpu.pipeline_mode<synchronous>, transform_indices = @transform_2, window_bounds = array<i64: 64, 1>}, {pipeline_mode = #tpu.pipeline_mode<synchronous>, transform_indices = @transform_3, window_bounds = array<i64: 64, 1>}, {transform_indices = @transform_4, window_bounds = array<i64: 1, 1>}, {transform_indices = @transform_5, window_bounds = array<i64: 1, 128>}]} {
    %c0 = arith.constant 0 : index
    %c0_0 = arith.constant 0 : index
    %0 = vector.load %arg1[%c0, %c0_0] : memref<128x128xf32, #tpu.memory_space<vmem>>, vector<128x128xf32>
    %c0_1 = arith.constant 0 : index
    %c0_2 = arith.constant 0 : index
    %1 = vector.load %arg2[%c0_1, %c0_2] : memref<64x128xf32, #tpu.memory_space<vmem>>, vector<64x128xf32>
    %cst = arith.constant dense<0.000000e+00> : vector<64x128xf32>
    %2 = tpu.matmul %1, %0, %cst {dimension_numbers = #tpu.dot_dimension_numbers<[1], [1], [0], [0], [0, 0, 1, 0], [], []>} : vector<64x128xf32>, vector<128x128xf32>, vector<64x128xf32> -> vector<64x128xf32>
    %c0_3 = arith.constant 0 : index
    %c0_4 = arith.constant 0 : index
    %3 = vector.load %arg3[%c0_3, %c0_4] : memref<64x1xf32, #tpu.memory_space<vmem>>, vector<64x1xf32>
    %4 = vector.broadcast %3 : vector<64x1xf32> to vector<64x128xf32>
    %5 = arith.addf %2, %4 : vector<64x128xf32>
    %cst_5 = arith.constant 0.000000e+00 : f32
    %6 = vector.broadcast %cst_5 : f32 to vector<64x128xf32>
    %7 = arith.maximumf %5, %6 : vector<64x128xf32>
    %c0_6 = arith.constant 0 : index
    %c0_7 = arith.constant 0 : index
    %8 = vector.load %arg4[%c0_6, %c0_7] : memref<64x1xf32, #tpu.memory_space<vmem>>, vector<64x1xf32>
    %9 = vector.broadcast %8 : vector<64x1xf32> to vector<64x128xf32>
    %10 = arith.mulf %7, %9 : vector<64x128xf32>
    %cst_8 = arith.constant dense<0.000000e+00> : vector<128xf32>
    %11 = vector.multi_reduction <add>, %10, %cst_8 [0] : vector<64x128xf32> to vector<128xf32>
    %12 = vector.shape_cast %11 : vector<128xf32> to vector<1x128xf32>
    %c0_9 = arith.constant 0 : index
    %c0_10 = arith.constant 0 : index
    %13 = memref.load %arg5[%c0_9, %c0_10] : memref<1x1xf32, #tpu.memory_space<smem>>
    %14 = vector.broadcast %13 : f32 to vector<1x128xf32>
    %15 = arith.addf %12, %14 : vector<1x128xf32>
    %cst_11 = arith.constant 2.000000e+01 : f32
    %16 = vector.broadcast %cst_11 : f32 to vector<1x128xf32>
    %17 = arith.cmpf ogt, %15, %16 : vector<1x128xf32>
    %cst_12 = arith.constant 2.000000e+01 : f32
    %18 = vector.broadcast %cst_12 : f32 to vector<1x128xf32>
    %19 = arith.minimumf %15, %18 : vector<1x128xf32>
    %20 = math.exp %19 : vector<1x128xf32>
    %21 = math.log1p %20 : vector<1x128xf32>
    %22 = arith.select %17, %15, %21 : vector<1x128xi1>, vector<1x128xf32>
    %c0_13 = arith.constant 0 : index
    %c0_14 = arith.constant 0 : index
    %23 = vector.load %arg6[%c0_13, %c0_14] : memref<1x128xf32, #tpu.memory_space<vmem>>, vector<1x128xf32>
    tpu.vector_store %arg6[%c0_13, %c0_14], %22 {strides = array<i32>} : memref<1x128xf32, #tpu.memory_space<vmem>>, vector<1x128xf32>,
    return
  }
  func.func @transform_0(%arg0: i32) -> (i32, i32) {
    %c0_i32 = arith.constant 0 : i32
    %c0_i32_0 = arith.constant 0 : i32
    return %arg0, %c0_i32 : i32, i32
  }
  func.func @transform_1(%arg0: i32) -> (i32, i32) {
    %c0_i32 = arith.constant 0 : i32
    %c0_i32_0 = arith.constant 0 : i32
    %c0_i32_1 = arith.constant 0 : i32
    return %c0_i32, %c0_i32_0 : i32, i32
  }
  func.func @transform_2(%arg0: i32) -> (i32, i32) {
    %c0_i32 = arith.constant 0 : i32
    %c0_i32_0 = arith.constant 0 : i32
    %c0_i32_1 = arith.constant 0 : i32
    return %c0_i32, %c0_i32_0 : i32, i32
  }
  func.func @transform_3(%arg0: i32) -> (i32, i32) {
    %c0_i32 = arith.constant 0 : i32
    %c0_i32_0 = arith.constant 0 : i32
    %c0_i32_1 = arith.constant 0 : i32
    return %c0_i32, %c0_i32_0 : i32, i32
  }
  func.func @transform_4(%arg0: i32) -> (i32, i32) {
    %c0_i32 = arith.constant 0 : i32
    %c0_i32_0 = arith.constant 0 : i32
    %c0_i32_1 = arith.constant 0 : i32
    return %c0_i32, %c0_i32_0 : i32, i32
  }
  func.func @transform_5(%arg0: i32) -> (i32, i32) {
    %c0_i32 = arith.constant 0 : i32
    %c0_i32_0 = arith.constant 0 : i32
    return %arg0, %c0_i32 : i32, i32
  }
}

</mosaic_0001>

<llo_original>
// kernel: tpu_custom_call.1
$region0: #{tpu_custom_call.1}
  #allocation0 [shape = 'u32[]', space=smem, size = 0x4, offset = 0x4, fixed_abs, tag = 'smem constant byte address 0x4 - core index']
  #allocation1 [shape = 'u32[144,128]{1,0:T(1,128)}', space=vmem, size = 0x12000, scoped, tag = 'internal scratch']
  #allocation2 [shape = 'f32[1,1]{1,0:T(1,128)S(6)}', space=smem, size = 0x200, scoped, tag = 'scoped memory for tpu_custom_call.1']
  %s0 = inlined_call_operand.vmem [shape: f32[128,128], index: 0, kind: input, shape index: {}]
  %s1 = inlined_call_operand.hbm [shape: f32[64,128], index: 1, kind: input, shape index: {}]
  %s2 = inlined_call_operand.vmem [shape: f32[64,1], index: 2, kind: input, shape index: {}]
  %s3 = inlined_call_operand.vmem [shape: f32[64,1], index: 3, kind: input, shape index: {}]
  %s4 = inlined_call_operand.<no memory space> [shape: f32[1,1], index: 4, kind: input, shape index: {}]
  %s5 = inlined_call_operand.hbm [shape: f32[1,128], index: 5, kind: output, shape index: {}]
  %s6 = sld [smem:[#allocation0]]
  $region34: #{tpu_custom_call.1} parent=0
    _
  %s8 = ssub.s32 1, %s6
  %s9 = scalar_select 0, %s8, %s6
  %10 = sst [smem:[#allocation2]] %s4
  $region1: #{tpu_custom_call.1} parent=0
    #allocation3 [shape = 'u8[32768]{0}', space=vmem, size = 0x8000, scoped, tag = 'input window, operand 1, single buffered']
    #allocation4 [shape = 's32[1]{0}', space=sflag, size = 0x4, scoped, tag = 'scoped memory for tpu_custom_call.1']
    #allocation5 [shape = 's32[1]{0}', space=sflag, size = 0x4, scoped, tag = 'scoped memory for tpu_custom_call.1']
    #allocation6 [shape = 'u8[512]{0}', space=vmem, size = 0x400, scoped, tag = 'output window, operand 0, single buffered']
    %11 = vsyncpa [#allocation4], 0
    %12 = vsyncpa [#allocation5], 0
    // Predicated region
    $region2: #{tpu_custom_call.1} parent=1 // pred_check
      _
    $region3: #{tpu_custom_call.1} parent=1 // pred_check_branch
      %14 = sbr.rel (0) target = $region5
    $region4: #{tpu_custom_call.1} parent=1 // pred_region
      _
    $region5: #{tpu_custom_call.1} parent=1 // pred_fallthru
      _
    // Predicated region
    $region6: #{tpu_custom_call.1} parent=1 // pred_check
      _
    $region7: #{tpu_custom_call.1} parent=1 // pred_check_branch
      %16 = sbr.rel (0) target = $region9
    $region8: #{tpu_custom_call.1} parent=1 // pred_region
      %s18 = ssub.s32 1024, 1024
      %19 = vsyncadd [#allocation4], %s18
      %s20 = sshll.u32 [#allocation3], 4
      %s21 = int_to_ptr.vmem [resolvable:$true] %s20
      %26 = dma.hbm_to_vmem [thread:$0]  %s1, 1024, %s21, [#allocation4], 128, 128, 8
    $region9: #{tpu_custom_call.1} parent=1 // pred_fallthru
      _
    // Predicated region
    $region10: #{tpu_custom_call.1} parent=1 // pred_check
      _
    $region11: #{tpu_custom_call.1} parent=1 // pred_check_branch
      %28 = sbr.rel (0) target = $region13
    $region12: #{tpu_custom_call.1} parent=1 // pred_region
      _
    $region13: #{tpu_custom_call.1} parent=1 // pred_fallthru
      _
    // Predicated region
    $region14: #{tpu_custom_call.1} parent=1 // pred_check
      _
    $region15: #{tpu_custom_call.1} parent=1 // pred_check_branch
      %30 = sbr.rel (0) target = $region17
    $region16: #{tpu_custom_call.1} parent=1 // pred_region
      _
    $region17: #{tpu_custom_call.1} parent=1 // pred_fallthru
      _
    // Predicated region
    $region18: #{tpu_custom_call.1} parent=1 // pred_check
      _
    $region19: #{tpu_custom_call.1} parent=1 // pred_check_branch
      %32 = sbr.rel (0) target = $region21
    $region20: #{tpu_custom_call.1} parent=1 // pred_region
      _
    $region21: #{tpu_custom_call.1} parent=1 // pred_fallthru
      _
    // Predicated region
    $region22: #{tpu_custom_call.1} parent=1 // pred_check
      _
    $region23: #{tpu_custom_call.1} parent=1 // pred_check_branch
      %34 = sbr.rel (0) target = $region25
    $region24: #{tpu_custom_call.1} parent=1 // pred_region
      %35 = dma.done [#allocation4], 1024
    $region25: #{tpu_custom_call.1} parent=1 // pred_fallthru
      _
    %v36 = vld [vmem:[%s0] sm:$0xff]
    %v37 = vld [vmem:[%s0 + $0x8] sm:$0xff]
    %v38 = vld [vmem:[%s0 + $0x10] sm:$0xff]
    %v39 = vld [vmem:[%s0 + $0x18] sm:$0xff]
    %v40 = vld [vmem:[%s0 + $0x20] sm:$0xff]
    %v41 = vld [vmem:[%s0 + $0x28] sm:$0xff]
    %v42 = vld [vmem:[%s0 + $0x30] sm:$0xff]
    %v43 = vld [vmem:[%s0 + $0x38] sm:$0xff]
    %v44 = vld [vmem:[%s0 + $0x40] sm:$0xff]
    %v45 = vld [vmem:[%s0 + $0x48] sm:$0xff]
    %v46 = vld [vmem:[%s0 + $0x50] sm:$0xff]
    %v47 = vld [vmem:[%s0 + $0x58] sm:$0xff]
    %v48 = vld [vmem:[%s0 + $0x60] sm:$0xff]
    %v49 = vld [vmem:[%s0 + $0x68] sm:$0xff]
    %v50 = vld [vmem:[%s0 + $0x70] sm:$0xff]
    %v51 = vld [vmem:[%s0 + $0x78] sm:$0xff]
    %v52 = vld [vmem:[#allocation3] sm:$0xff]
    %v53 = vld [vmem:[#allocation3 + $0x8] sm:$0xff]
    %v54 = vld [vmem:[#allocation3 + $0x10] sm:$0xff]
    %v55 = vld [vmem:[#allocation3 + $0x18] sm:$0xff]
    %v56 = vld [vmem:[#allocation3 + $0x20] sm:$0xff]
    %v57 = vld [vmem:[#allocation3 + $0x28] sm:$0xff]
    %v58 = vld [vmem:[#allocation3 + $0x30] sm:$0xff]
    %v59 = vld [vmem:[#allocation3 + $0x38] sm:$0xff]
    %v60 = vld [vmem:[%s2] sm:$0xff]
    %v61 = vld [vmem:[%s2 + $0x8] sm:$0xff]
    %v62 = vld [vmem:[%s2 + $0x10] sm:$0xff]
    %v63 = vld [vmem:[%s2 + $0x18] sm:$0xff]
    %v64 = vld [vmem:[%s2 + $0x20] sm:$0xff]
    %v65 = vld [vmem:[%s2 + $0x28] sm:$0xff]
    %v66 = vld [vmem:[%s2 + $0x30] sm:$0xff]
    %v67 = vld [vmem:[%s2 + $0x38] sm:$0xff]
    %69 = vset.pattern.permute.xlu0 0
    %70 = vperm.xlu0 %69, %v60
    %v71 = vpop.permute.xlu0 %70
    %74 = vset.pattern.permute.xlu0 0
    %75 = vperm.xlu0 %74, %v61
    %v76 = vpop.permute.xlu0 %75
    %79 = vset.pattern.permute.xlu0 0
    %80 = vperm.xlu0 %79, %v62
    %v81 = vpop.permute.xlu0 %80
    %84 = vset.pattern.permute.xlu0 0
    %85 = vperm.xlu0 %84, %v63
    %v86 = vpop.permute.xlu0 %85
    %89 = vset.pattern.permute.xlu0 0
    %90 = vperm.xlu0 %89, %v64
    %v91 = vpop.permute.xlu0 %90
    %94 = vset.pattern.permute.xlu0 0
    %95 = vperm.xlu0 %94, %v65
    %v96 = vpop.permute.xlu0 %95
    %99 = vset.pattern.permute.xlu0 0
    %100 = vperm.xlu0 %99, %v66
    %v101 = vpop.permute.xlu0 %100
    %104 = vset.pattern.permute.xlu0 0
    %105 = vperm.xlu0 %104, %v67
    %v106 = vpop.permute.xlu0 %105
    %108 = vmatprep.subr.mxu0 0.0
    %109 = vmatpush1.xpose.msra.mxu0 %v36
    %110 = vmatprep.subr.mxu0 0.0
    %111 = vmatpush1.xpose.msra.mxu0 %v37
    %112 = vmatprep.subr.mxu0 0.0
    %113 = vmatpush1.xpose.msra.mxu0 %v38
    %114 = vmatprep.subr.mxu0 0.0
    %115 = vmatpush1.xpose.msra.mxu0 %v39
    %116 = vmatprep.subr.mxu0 0.0
    %117 = vmatpush1.xpose.msra.mxu0 %v40
    %118 = vmatprep.subr.mxu0 0.0
    %119 = vmatpush1.xpose.msra.mxu0 %v41
    %120 = vmatprep.subr.mxu0 0.0
    %121 = vmatpush1.xpose.msra.mxu0 %v42
    %122 = vmatprep.subr.mxu0 0.0
    %123 = vmatpush1.xpose.msra.mxu0 %v43
    %124 = vmatprep.subr.mxu0 0.0
    %125 = vmatpush1.xpose.msra.mxu0 %v44
    %126 = vmatprep.subr.mxu0 0.0
    %127 = vmatpush1.xpose.msra.mxu0 %v45
    %128 = vmatprep.subr.mxu0 0.0
    %129 = vmatpush1.xpose.msra.mxu0 %v46
    %130 = vmatprep.subr.mxu0 0.0
    %131 = vmatpush1.xpose.msra.mxu0 %v47
    %132 = vmatprep.subr.mxu0 0.0
    %133 = vmatpush1.xpose.msra.mxu0 %v48
    %134 = vmatprep.subr.mxu0 0.0
    %135 = vmatpush1.xpose.msra.mxu0 %v49
    %136 = vmatprep.subr.mxu0 0.0
    %137 = vmatpush1.xpose.msra.mxu0 %v50
    %138 = vmatprep.subr.mxu0 0.0
    %139 = vmatpush1.xpose.msra.mxu0 %v51
    %140 = vmatprep.subr.mxu0 0.0
    %141 = vmatpush1.xpose.msra.mxu0 0.0
    %142 = vmatprep.subr.mxu0 0.0
    %143 = vmatpush1.xpose.msra.mxu0 0.0
    %144 = vmatprep.subr.mxu0 0.0
    %145 = vmatpush1.xpose.msra.mxu0 0.0
    %146 = vmatprep.subr.mxu0 0.0
    %147 = vmatpush1.xpose.msra.mxu0 0.0
    %148 = vmatprep.subr.mxu0 0.0
    %149 = vmatpush1.xpose.msra.mxu0 0.0
    %150 = vmatprep.subr.mxu0 0.0
    %151 = vmatpush1.xpose.msra.mxu0 0.0
    %152 = vmatprep.subr.mxu0 0.0
    %153 = vmatpush1.xpose.msra.mxu0 0.0
    %154 = vmatprep.subr.mxu0 0.0
    %155 = vmatpush1.xpose.msra.mxu0 0.0
    %156 = vmatprep.subr.mxu0 0.0
    %157 = vmatpush1.xpose.msra.mxu0 0.0
    %158 = vmatprep.subr.mxu0 0.0
    %159 = vmatpush1.xpose.msra.mxu0 0.0
    %160 = vmatprep.subr.mxu0 0.0
    %161 = vmatpush1.xpose.msra.mxu0 0.0
    %162 = vmatprep.subr.mxu0 0.0
    %163 = vmatpush1.xpose.msra.mxu0 0.0
    %164 = vmatprep.subr.mxu0 0.0
    %165 = vmatpush1.xpose.msra.mxu0 0.0
    %166 = vmatprep.subr.mxu0 0.0
    %167 = vmatpush1.xpose.msra.mxu0 0.0
    %168 = vmatprep.subr.mxu0 0.0
    %169 = vmatpush1.xpose.msra.mxu0 0.0
    %170 = vmatprep.subr.mxu0 0.0
    %171 = vmatpush1.xpose.msra.mxu0 0.0
    %172 = vmatprep.mubr.f32.mxu0 0.0
    %173 = vmatmul.mubr.f32.gmra.mrb[0].mxu0 %v52
    %v174 = vpop.f32.mrb[0].mxu0
    %v175 = vadd.f32 %v71, %v174
    %v176 = vpop.f32.mrb[0].mxu0
    %177 = vmatprep.mubr.f32.mxu0 0.0
    %178 = vmatmul.mubr.f32.gmra.mrb[0].mxu0 %v53
    %v179 = vpop.f32.mrb[0].mxu0
    %v180 = vadd.f32 %v76, %v179
    %v181 = vpop.f32.mrb[0].mxu0
    %182 = vmatprep.mubr.f32.mxu0 0.0
    %183 = vmatmul.mubr.f32.gmra.mrb[0].mxu0 %v54
    %v184 = vpop.f32.mrb[0].mxu0
    %v185 = vadd.f32 %v81, %v184
    %v186 = vpop.f32.mrb[0].mxu0
    %187 = vmatprep.mubr.f32.mxu0 0.0
    %188 = vmatmul.mubr.f32.gmra.mrb[0].mxu0 %v55
    %v189 = vpop.f32.mrb[0].mxu0
    %v190 = vadd.f32 %v86, %v189
    %v191 = vpop.f32.mrb[0].mxu0
    %192 = vmatprep.mubr.f32.mxu0 0.0
    %193 = vmatmul.mubr.f32.gmra.mrb[0].mxu0 %v56
    %v194 = vpop.f32.mrb[0].mxu0
    %v195 = vadd.f32 %v91, %v194
    %v196 = vpop.f32.mrb[0].mxu0
    %197 = vmatprep.mubr.f32.mxu0 0.0
    %198 = vmatmul.mubr.f32.gmra.mrb[0].mxu0 %v57
    %v199 = vpop.f32.mrb[0].mxu0
    %v200 = vadd.f32 %v96, %v199
    %v201 = vpop.f32.mrb[0].mxu0
    %202 = vmatprep.mubr.f32.mxu0 0.0
    %203 = vmatmul.mubr.f32.gmra.mrb[0].mxu0 %v58
    %v204 = vpop.f32.mrb[0].mxu0
    %v205 = vadd.f32 %v101, %v204
    %v206 = vpop.f32.mrb[0].mxu0
    %207 = vmatprep.mubr.f32.mxu0 0.0
    %208 = vmatmul.mubr.f32.gmra.mrb[0].mxu0 %v59
    %v209 = vpop.f32.mrb[0].mxu0
    %v210 = vadd.f32 %v106, %v209
    %v211 = vpop.f32.mrb[0].mxu0
    %212 = vdwg.mxu0
    %v213 = vmax.f32 %v175, 0.0
    %v214 = vmax.f32 %v180, 0.0
    %v215 = vmax.f32 %v185, 0.0
    %v216 = vmax.f32 %v190, 0.0
    %v217 = vmax.f32 %v195, 0.0
    %v218 = vmax.f32 %v200, 0.0
    %v219 = vmax.f32 %v205, 0.0
    %v220 = vmax.f32 %v210, 0.0
    %v221 = vld [vmem:[%s3] sm:$0xff]
    %v222 = vld [vmem:[%s3 + $0x8] sm:$0xff]
    %v223 = vld [vmem:[%s3 + $0x10] sm:$0xff]
    %v224 = vld [vmem:[%s3 + $0x18] sm:$0xff]
    %v225 = vld [vmem:[%s3 + $0x20] sm:$0xff]
    %v226 = vld [vmem:[%s3 + $0x28] sm:$0xff]
    %v227 = vld [vmem:[%s3 + $0x30] sm:$0xff]
    %v228 = vld [vmem:[%s3 + $0x38] sm:$0xff]
    %230 = vset.pattern.permute.xlu0 0
    %231 = vperm.xlu0 %230, %v221
    %v232 = vpop.permute.xlu0 %231
    %235 = vset.pattern.permute.xlu0 0
    %236 = vperm.xlu0 %235, %v222
    %v237 = vpop.permute.xlu0 %236
    %240 = vset.pattern.permute.xlu0 0
    %241 = vperm.xlu0 %240, %v223
    %v242 = vpop.permute.xlu0 %241
    %245 = vset.pattern.permute.xlu0 0
    %246 = vperm.xlu0 %245, %v224
    %v247 = vpop.permute.xlu0 %246
    %250 = vset.pattern.permute.xlu0 0
    %251 = vperm.xlu0 %250, %v225
    %v252 = vpop.permute.xlu0 %251
    %255 = vset.pattern.permute.xlu0 0
    %256 = vperm.xlu0 %255, %v226
    %v257 = vpop.permute.xlu0 %256
    %260 = vset.pattern.permute.xlu0 0
    %261 = vperm.xlu0 %260, %v227
    %v262 = vpop.permute.xlu0 %261
    %265 = vset.pattern.permute.xlu0 0
    %266 = vperm.xlu0 %265, %v228
    %v267 = vpop.permute.xlu0 %266
    %v269 = vmul.f32 %v213, %v232
    %v270 = vmul.f32 %v214, %v237
    %v271 = vmul.f32 %v215, %v242
    %v272 = vmul.f32 %v216, %v247
    %v273 = vmul.f32 %v217, %v252
    %v274 = vmul.f32 %v218, %v257
    %v275 = vmul.f32 %v219, %v262
    %v276 = vmul.f32 %v220, %v267
    %v277 = vadd.f32 %v269, %v270
    %v278 = vadd.f32 %v277, %v271
    %v279 = vadd.f32 %v278, %v272
    %v280 = vadd.f32 %v279, %v273
    %v281 = vadd.f32 %v280, %v274
    %v282 = vadd.f32 %v281, %v275
    %v283 = vadd.f32 %v282, %v276
    %v284 = vrot.slane %v283, 4
    %v285 = vadd.f32 %v283, %v284
    %v286 = vrot.slane %v285, 2
    %v287 = vadd.f32 %v285, %v286
    %v288 = vrot.slane %v287, 1
    %v289 = vadd.f32 %v287, %v288
    %s290 = sld [smem:[#allocation2]]
    %v291 = vstv %s290
    %v292 = vadd.f32 %v289, %v291
    %vm293 = vcmp.gt.f32.partialorder %v292, 20.0
    %v294 = vmin.f32 %v292, 20.0
    %v295 = vmul.f32 %v294, 1.442695
    %v296 = vpow.pop %v295
    %v297 = vadd.f32 %v296, 1.0
    %v298 = vlog2.pop %v297
    %v299 = vmul.f32 %v298, 0.6931472
    %v300 = vmul.f32 -0.5, %v296
    %v301 = vadd.f32 %v300, 1.0
    %v302 = vmul.f32 %v301, %v296
    %v303 = vand.u32 2147483647, %v296
    %vm304 = vcmp.lt.f32.partialorder %v303, 0.0004427343
    %v305 = vsel %vm304, %v302, %v299
    %v306 = vsel %vm293, %v292, %v305
    %307 = vst [vmem:[#allocation6] sm:$0x1] %v306
    // Predicated region
    $region26: #{tpu_custom_call.1} parent=1 // pred_check
      _
    $region27: #{tpu_custom_call.1} parent=1 // pred_check_branch
      %309 = sbr.rel (0) target = $region29
    $region28: #{tpu_custom_call.1} parent=1 // pred_region
      %s311 = ssub.s32 16, 16
      %312 = vsyncadd [#allocation5], %s311
      %s314 = sshll.u32 [#allocation6], 4
      %s315 = int_to_ptr.vmem [resolvable:$true] %s314
      %317 = dma.vmem_to_hbm [thread:$0]  %s315, 16, %s5, [#allocation5]
    $region29: #{tpu_custom_call.1} parent=1 // pred_fallthru
      _
    // Predicated region
    $region30: #{tpu_custom_call.1} parent=1 // pred_check
      _
    $region31: #{tpu_custom_call.1} parent=1 // pred_check_branch
      %319 = sbr.rel (0) target = $region33
    $region32: #{tpu_custom_call.1} parent=1 // pred_region
      %320 = dma.done [#allocation5], 16
    $region33: #{tpu_custom_call.1} parent=1 // pred_fallthru
      _
    %321 = vsyncpa [#allocation4], 1
    %322 = vsyncpa [#allocation5], 1

</llo_original>
